<compile_context>
chip_gen: v7x
topology: tpu7x:2x2x1
jax: 0.10.0
libtpu: 0.0.40
codegen_flags: <defaults>
</compile_context>

<pallas_src>
import functools

import jax
import jax.numpy as jnp
from jax.experimental import pallas as pl
from jax.experimental.pallas import tpu as pltpu


_TARGET_TILE_BYTES = 2 * 1024 * 1024   # per-input VMEM tile target (native dtype)
_MIN_PALLAS_ELEMS = 8 * 128            # below this, pure JAX is cheaper than launch


def _huber_kernel(gt_ref, pr_ref, w_ref, out_ref, *, delta, bc):
    """One row-tile per grid step.

    gt_ref, pr_ref: (TM, HW)     heatmap tiles in their native dtype
    w_ref:          (TM, 1)      per-row (per-class) weights, f32
    out_ref:        (1, 8, 128)  f32 partial-sum tile owned by this grid step
    """
    i = pl.program_id(0)
    tm = gt_ref.shape[0]

    gt = gt_ref[...].astype(jnp.float32)
    pr = pr_ref[...].astype(jnp.float32)

    d = gt - pr
    ad = jnp.abs(d)
    squares = 0.5 * d * d
    linears = (0.5 * delta) * ad + (0.5 * delta * delta)
    hubers = jnp.where(ad < delta, squares, linears)

    # per-row sum over H*W, then per-row class weight
    row_sums = jnp.sum(hubers, axis=1, keepdims=True)        # (TM, 1)
    weighted = row_sums * w_ref[...]                         # (TM, 1)

    # mask rows past B*C (a ragged last tile reads uninitialized VMEM)
    rid = i * tm + jax.lax.broadcasted_iota(jnp.int32, (tm, 1), 0)
    weighted = jnp.where(rid < bc, weighted, 0.0)

    partial = jnp.sum(weighted)                              # scalar partial
    out_ref[...] = jnp.full(out_ref.shape, partial, dtype=jnp.float32)


def _huber_loss_jax(heatmaps_gt, heatmaps_pred, weights, delta):
    """Pure-JAX forward (also used as tiny-input fallback). weights: (C,) f32."""
    gt = heatmaps_gt.astype(jnp.float32)
    pr = heatmaps_pred.astype(jnp.float32)
    d = gt - pr
    ad = jnp.abs(d)
    squares = 0.5 * d * d
    linears = (0.5 * delta) * ad + (0.5 * delta * delta)
    hubers = jnp.where(ad < delta, squares, linears)
    means = hubers.mean(axis=(2, 3)) * weights[None, :]
    return means.mean()


def heatmap_huber(heatmaps_gt, heatmaps_pred, class_weights,
                  normalize_weights=False, delta=1.0):
    """Pallas equivalent of HeatmapHuber.forward.  Inputs are NCHW."""
    B, C, H, W = heatmaps_gt.shape
    assert heatmaps_pred.shape == heatmaps_gt.shape
    assert len(class_weights) == C

    # deterministic "parameter" setup (mirrors nn.Parameter init in __init__)
    weights = jnp.asarray(class_weights, dtype=jnp.float32)   # (C,)
    if normalize_weights:
        weights = weights / jnp.sum(weights)

    hw = H * W
    bc = B * C

    if bc * hw < _MIN_PALLAS_ELEMS:
        # Kernel launch + pipeline prologue would dominate for a few KiB of data.
        return _huber_loss_jax(heatmaps_gt, heatmaps_pred, weights, float(delta))

    # Free, contiguous reshapes; keep native dtype (no extra HBM traffic).
    gt2 = heatmaps_gt.reshape(bc, hw)
    pr2 = heatmaps_pred.reshape(bc, hw)
    # row r of the flat view is (b = r // C, c = r % C)  ->  weight[c]
    w_rows = jnp.broadcast_to(weights[None, :], (B, C)).reshape(bc, 1)

    # Pick a row tile: multiple of 8, ~2 MiB per input tile, no larger than B*C.
    # (For extremely large H*W — a single row > ~2 MiB — a second grid axis over
    #  H*W would be needed; heatmap spatial sizes don't hit that in practice.)
    itemsize = jnp.dtype(gt2.dtype).itemsize
    if bc <= 8:
        tm = bc                                        # full-dim block
    else:
        tm = max(8, (_TARGET_TILE_BYTES // (hw * itemsize)) // 8 * 8)
        tm = min(tm, (bc // 8) * 8)
    grid = pl.cdiv(bc, tm)

    kernel = functools.partial(_huber_kernel, delta=float(delta), bc=bc)

    partials = pl.pallas_call(
        kernel,
        out_shape=jax.ShapeDtypeStruct((grid, 8, 128), jnp.float32),
        grid_spec=pltpu.PrefetchScalarGridSpec(
            num_scalar_prefetch=0,
            grid=(grid,),
            in_specs=[
                pl.BlockSpec((tm, hw), lambda i: (i, 0)),   # gt tile
                pl.BlockSpec((tm, hw), lambda i: (i, 0)),   # pred tile
                pl.BlockSpec((tm, 1), lambda i: (i, 0)),    # per-row weights
            ],
            out_specs=pl.BlockSpec((1, 8, 128), lambda i: (i, 0, 0)),
        ),
        compiler_params=pltpu.CompilerParams(
            dimension_semantics=("parallel",),
            vmem_limit_bytes=48 * 1024 * 1024,
        ),
    )(gt2, pr2, w_rows)

    # Tiny epilogue in JAX: sum per-block partials, apply mean scalings.
    return jnp.sum(partials[:, 0, 0]) / (bc * hw)


def _reference(heatmaps_gt, heatmaps_pred, class_weights,
               normalize_weights=False, delta=1.0):
    """Pure-JAX reference mirroring the PyTorch forward exactly."""
    weights = jnp.asarray(class_weights, dtype=jnp.float32)
    if normalize_weights:
        weights = weights / jnp.sum(weights)
    return _huber_loss_jax(heatmaps_gt, heatmaps_pred, weights, float(delta))


if __name__ == "__main__":
    key = jax.random.PRNGKey(0)
    k_gt, k_pred = jax.random.split(key)

    B, C, H, W = 2, 3, 32, 32
    class_weights = (1.0, 2.0, 3.0)
    delta = 1.0

    # gt heatmaps in [0, 1], predictions perturbed (some diffs exceed delta)
    heatmaps_gt = jax.random.uniform(k_gt, (B, C, H, W), dtype=jnp.float32)
    heatmaps_pred = heatmaps_gt + 1.5 * jax.random.normal(
        k_pred, (B, C, H, W), dtype=jnp.float32)

    # f32 path
    loss = heatmap_huber(heatmaps_gt, heatmaps_pred, class_weights,
                         normalize_weights=False, delta=delta)
    loss = jax.block_until_ready(loss)
    ref = _reference(heatmaps_gt, heatmaps_pred, class_weights,
                     normalize_weights=False, delta=delta)
    assert jnp.allclose(loss, ref, rtol=1e-5, atol=1e-6), (loss, ref)

    # bf16 path (exercises dtype-preserving DMA) + normalized weights
    gt_bf16 = heatmaps_gt.astype(jnp.bfloat16)
    pr_bf16 = heatmaps_pred.astype(jnp.bfloat16)
    loss_bf16 = heatmap_huber(gt_bf16, pr_bf16, class_weights,
                              normalize_weights=True, delta=delta)
    loss_bf16 = jax.block_until_ready(loss_bf16)
    ref_bf16 = _reference(gt_bf16, pr_bf16, class_weights,
                          normalize_weights=True, delta=delta)
    assert jnp.allclose(loss_bf16, ref_bf16, rtol=5e-3, atol=1e-4), (
        loss_bf16, ref_bf16)

    print("KERNEL_OK")
</pallas_src>

<mosaic_0001>
module attributes {stable_mosaic.version = 11 : i64} {
  func.func @_huber_kernel(%arg0: i32, %arg1: memref<6x1024xf32, #tpu.memory_space<vmem>>, %arg2: memref<6x1024xf32, #tpu.memory_space<vmem>>, %arg3: memref<6x1xf32, #tpu.memory_space<vmem>>, %arg4: memref<1x8x128xf32, #tpu.memory_space<vmem>>) attributes {dimension_semantics = [#tpu.dimension_semantics<parallel>], iteration_bounds = array<i64: 1>, scalar_prefetch = 0 : i64, scratch_operands = 0 : i64, tpu.core_type = #tpu.core_type<tc>, window_params = [{transform_indices = @transform_0, window_bounds = array<i64: 6, 1024>}, {transform_indices = @transform_1, window_bounds = array<i64: 6, 1024>}, {transform_indices = @transform_2, window_bounds = array<i64: 6, 1>}, {transform_indices = @transform_3, window_bounds = array<i64: 1, 8, 128>}]} {
    %c0 = arith.constant 0 : index
    %c0_0 = arith.constant 0 : index
    %0 = vector.load %arg1[%c0, %c0_0] : memref<6x1024xf32, #tpu.memory_space<vmem>>, vector<6x1024xf32>
    %c0_1 = arith.constant 0 : index
    %c0_2 = arith.constant 0 : index
    %1 = vector.load %arg2[%c0_1, %c0_2] : memref<6x1024xf32, #tpu.memory_space<vmem>>, vector<6x1024xf32>
    %2 = arith.subf %0, %1 : vector<6x1024xf32>
    %3 = math.absf %2 : vector<6x1024xf32>
    %cst = arith.constant 5.000000e-01 : f32
    %4 = vector.broadcast %cst : f32 to vector<6x1024xf32>
    %5 = arith.mulf %4, %2 : vector<6x1024xf32>
    %6 = arith.mulf %5, %2 : vector<6x1024xf32>
    %cst_3 = arith.constant 5.000000e-01 : f32
    %7 = vector.broadcast %cst_3 : f32 to vector<6x1024xf32>
    %8 = arith.mulf %7, %3 : vector<6x1024xf32>
    %cst_4 = arith.constant 5.000000e-01 : f32
    %9 = vector.broadcast %cst_4 : f32 to vector<6x1024xf32>
    %10 = arith.addf %8, %9 : vector<6x1024xf32>
    %cst_5 = arith.constant 1.000000e+00 : f32
    %11 = vector.broadcast %cst_5 : f32 to vector<6x1024xf32>
    %12 = arith.cmpf olt, %3, %11 : vector<6x1024xf32>
    %13 = arith.select %12, %6, %10 : vector<6x1024xi1>, vector<6x1024xf32>
    %cst_6 = arith.constant dense<0.000000e+00> : vector<6xf32>
    %14 = vector.multi_reduction <add>, %13, %cst_6 [1] : vector<6x1024xf32> to vector<6xf32>
    %15 = vector.shape_cast %14 : vector<6xf32> to vector<6x1xf32>
    %c0_7 = arith.constant 0 : index
    %c0_8 = arith.constant 0 : index
    %16 = vector.load %arg3[%c0_7, %c0_8] : memref<6x1xf32, #tpu.memory_space<vmem>>, vector<6x1xf32>
    %17 = arith.mulf %15, %16 : vector<6x1xf32>
    %c6_i32 = arith.constant 6 : i32
    %18 = arith.muli %arg0, %c6_i32 : i32
    %19 = tpu.iota {dimensions = array<i32: 0>} : vector<6x1xi32>
    %20 = vector.broadcast %18 : i32 to vector<6x1xi32>
    %21 = arith.addi %20, %19 : vector<6x1xi32>
    %c6_i32_9 = arith.constant 6 : i32
    %22 = vector.broadcast %c6_i32_9 : i32 to vector<6x1xi32>
    %23 = arith.cmpi slt, %21, %22 : vector<6x1xi32>
    %cst_10 = arith.constant 0.000000e+00 : f32
    %24 = vector.broadcast %cst_10 : f32 to vector<6x1xf32>
    %25 = arith.select %23, %17, %24 : vector<6x1xi1>, vector<6x1xf32>
    %26 = vector.shape_cast %25 : vector<6x1xf32> to vector<1x6x1xf32>
    %cst_11 = arith.constant dense<0.000000e+00> : vector<1xf32>
    %27 = vector.multi_reduction <add>, %26, %cst_11 [1, 2] : vector<1x6x1xf32> to vector<1xf32>
    %28 = vector.shape_cast %27 : vector<1xf32> to vector<1x1x1xf32>
    %29 = vector.extract %28[0, 0, 0] : f32 from vector<1x1x1xf32>
    %30 = vector.broadcast %29 : f32 to vector<1x8x128xf32>
    %c0_12 = arith.constant 0 : index
    %c0_13 = arith.constant 0 : index
    %c0_14 = arith.constant 0 : index
    %31 = vector.load %arg4[%c0_12, %c0_13, %c0_14] : memref<1x8x128xf32, #tpu.memory_space<vmem>>, vector<1x8x128xf32>
    tpu.vector_store %arg4[%c0_12, %c0_13, %c0_14], %30 {strides = array<i32>} : memref<1x8x128xf32, #tpu.memory_space<vmem>>, vector<1x8x128xf32>,
    return
  }
  func.func @transform_0(%arg0: i32) -> (i32, i32) {
    %c0_i32 = arith.constant 0 : i32
    %c0_i32_0 = arith.constant 0 : i32
    return %arg0, %c0_i32 : i32, i32
  }
  func.func @transform_1(%arg0: i32) -> (i32, i32) {
    %c0_i32 = arith.constant 0 : i32
    %c0_i32_0 = arith.constant 0 : i32
    return %arg0, %c0_i32 : i32, i32
  }
  func.func @transform_2(%arg0: i32) -> (i32, i32) {
    %c0_i32 = arith.constant 0 : i32
    %c0_i32_0 = arith.constant 0 : i32
    return %arg0, %c0_i32 : i32, i32
  }
  func.func @transform_3(%arg0: i32) -> (i32, i32, i32) {
    %c0_i32 = arith.constant 0 : i32
    %c0_i32_0 = arith.constant 0 : i32
    %c0_i32_1 = arith.constant 0 : i32
    return %arg0, %c0_i32, %c0_i32_0 : i32, i32, i32
  }
}

</mosaic_0001>

<llo_original>
// kernel: tpu_custom_call.1
$region0: #{tpu_custom_call.1}
  #allocation0 [shape = 'u32[]', space=smem, size = 0x4, offset = 0x4, fixed_abs, tag = 'smem constant byte address 0x4 - core index']
  #allocation1 [shape = 'u32[144,128]{1,0:T(1,128)}', space=vmem, size = 0x12000, scoped, tag = 'internal scratch']
  %s0 = inlined_call_operand.hbm [shape: f32[6,1024], index: 0, kind: input, shape index: {}]
  %s1 = inlined_call_operand.hbm [shape: f32[6,1024], index: 1, kind: input, shape index: {}]
  %s2 = inlined_call_operand.vmem [shape: f32[6,1], index: 2, kind: input, shape index: {}]
  %s3 = inlined_call_operand.hbm [shape: f32[1,8,128], index: 3, kind: output, shape index: {}]
  %s4 = sld [smem:[#allocation0]]
  $region30: #{tpu_custom_call.1} parent=0
    _
  %s6 = ssub.s32 1, %s4
  %s7 = scalar_select 0, %s6, %s4
  $region1: #{tpu_custom_call.1} parent=0
    #allocation2 [shape = 'u8[32768]{0}', space=vmem, size = 0x8000, scoped, tag = 'input window, operand 0, single buffered']
    #allocation3 [shape = 's32[1]{0}', space=sflag, size = 0x4, scoped, tag = 'scoped memory for tpu_custom_call.1']
    #allocation4 [shape = 's32[1]{0}', space=sflag, size = 0x4, scoped, tag = 'scoped memory for tpu_custom_call.1']
    #allocation5 [shape = 'u8[32768]{0}', space=vmem, size = 0x8000, scoped, tag = 'input window, operand 1, single buffered']
    #allocation6 [shape = 's32[1]{0}', space=sflag, size = 0x4, scoped, tag = 'scoped memory for tpu_custom_call.1']
    #allocation7 [shape = 'u8[4096]{0}', space=vmem, size = 0x1000, scoped, tag = 'output window, operand 0, single buffered']
    %8 = vsyncpa [#allocation3], 0
    %9 = vsyncpa [#allocation6], 0
    %10 = vsyncpa [#allocation4], 0
    // Predicated region
    $region2: #{tpu_custom_call.1} parent=1 // pred_check
      _
    $region3: #{tpu_custom_call.1} parent=1 // pred_check_branch
      %12 = sbr.rel (0) target = $region5
    $region4: #{tpu_custom_call.1} parent=1 // pred_region
      %s14 = ssub.s32 1024, 1024
      %15 = vsyncadd [#allocation3], %s14
      %s17 = sshll.u32 [#allocation2], 4
      %s18 = int_to_ptr.vmem [resolvable:$true] %s17
      %20 = dma.hbm_to_vmem [thread:$0]  %s0, 1024, %s18, [#allocation3]
    $region5: #{tpu_custom_call.1} parent=1 // pred_fallthru
      _
    // Predicated region
    $region6: #{tpu_custom_call.1} parent=1 // pred_check
      _
    $region7: #{tpu_custom_call.1} parent=1 // pred_check_branch
      %22 = sbr.rel (0) target = $region9
    $region8: #{tpu_custom_call.1} parent=1 // pred_region
      %s24 = ssub.s32 1024, 1024
      %25 = vsyncadd [#allocation6], %s24
      %s27 = sshll.u32 [#allocation5], 4
      %s28 = int_to_ptr.vmem [resolvable:$true] %s27
      %30 = dma.hbm_to_vmem [thread:$0]  %s1, 1024, %s28, [#allocation6]
    $region9: #{tpu_custom_call.1} parent=1 // pred_fallthru
      _
    // Predicated region
    $region10: #{tpu_custom_call.1} parent=1 // pred_check
      _
    $region11: #{tpu_custom_call.1} parent=1 // pred_check_branch
      %32 = sbr.rel (0) target = $region13
    $region12: #{tpu_custom_call.1} parent=1 // pred_region
      _
    $region13: #{tpu_custom_call.1} parent=1 // pred_fallthru
      _
    // Predicated region
    $region14: #{tpu_custom_call.1} parent=1 // pred_check
      _
    $region15: #{tpu_custom_call.1} parent=1 // pred_check_branch
      %34 = sbr.rel (0) target = $region17
    $region16: #{tpu_custom_call.1} parent=1 // pred_region
      %35 = dma.done [#allocation3], 1024
    $region17: #{tpu_custom_call.1} parent=1 // pred_fallthru
      _
    // Predicated region
    $region18: #{tpu_custom_call.1} parent=1 // pred_check
      _
    $region19: #{tpu_custom_call.1} parent=1 // pred_check_branch
      %37 = sbr.rel (0) target = $region21
    $region20: #{tpu_custom_call.1} parent=1 // pred_region
      %38 = dma.done [#allocation6], 1024
    $region21: #{tpu_custom_call.1} parent=1 // pred_fallthru
      _
    %v39 = vld [vmem:[#allocation2] sm:$0x3f]
    %v40 = vld [vmem:[#allocation2 + $0x8] sm:$0x3f]
    %v41 = vld [vmem:[#allocation2 + $0x10] sm:$0x3f]
    %v42 = vld [vmem:[#allocation2 + $0x18] sm:$0x3f]
    %v43 = vld [vmem:[#allocation2 + $0x20] sm:$0x3f]
    %v44 = vld [vmem:[#allocation2 + $0x28] sm:$0x3f]
    %v45 = vld [vmem:[#allocation2 + $0x30] sm:$0x3f]
    %v46 = vld [vmem:[#allocation2 + $0x38] sm:$0x3f]
    %v47 = vld [vmem:[#allocation5] sm:$0x3f]
    %v48 = vld [vmem:[#allocation5 + $0x8] sm:$0x3f]
    %v49 = vld [vmem:[#allocation5 + $0x10] sm:$0x3f]
    %v50 = vld [vmem:[#allocation5 + $0x18] sm:$0x3f]
    %v51 = vld [vmem:[#allocation5 + $0x20] sm:$0x3f]
    %v52 = vld [vmem:[#allocation5 + $0x28] sm:$0x3f]
    %v53 = vld [vmem:[#allocation5 + $0x30] sm:$0x3f]
    %v54 = vld [vmem:[#allocation5 + $0x38] sm:$0x3f]
    %v55 = vsub.f32 %v39, %v47
    %v56 = vsub.f32 %v40, %v48
    %v57 = vsub.f32 %v41, %v49
    %v58 = vsub.f32 %v42, %v50
    %v59 = vsub.f32 %v43, %v51
    %v60 = vsub.f32 %v44, %v52
    %v61 = vsub.f32 %v45, %v53
    %v62 = vsub.f32 %v46, %v54
    %v63 = vand.u32 2147483647, %v55
    %v64 = vand.u32 2147483647, %v56
    %v65 = vand.u32 2147483647, %v57
    %v66 = vand.u32 2147483647, %v58
    %v67 = vand.u32 2147483647, %v59
    %v68 = vand.u32 2147483647, %v60
    %v69 = vand.u32 2147483647, %v61
    %v70 = vand.u32 2147483647, %v62
    %v71 = vmul.f32 %v55, 0.5
    %v72 = vmul.f32 %v56, 0.5
    %v73 = vmul.f32 %v57, 0.5
    %v74 = vmul.f32 %v58, 0.5
    %v75 = vmul.f32 %v59, 0.5
    %v76 = vmul.f32 %v60, 0.5
    %v77 = vmul.f32 %v61, 0.5
    %v78 = vmul.f32 %v62, 0.5
    %v79 = vmul.f32 %v71, %v55
    %v80 = vmul.f32 %v72, %v56
    %v81 = vmul.f32 %v73, %v57
    %v82 = vmul.f32 %v74, %v58
    %v83 = vmul.f32 %v75, %v59
    %v84 = vmul.f32 %v76, %v60
    %v85 = vmul.f32 %v77, %v61
    %v86 = vmul.f32 %v78, %v62
    %v87 = vmul.f32 %v63, 0.5
    %v88 = vmul.f32 %v64, 0.5
    %v89 = vmul.f32 %v65, 0.5
    %v90 = vmul.f32 %v66, 0.5
    %v91 = vmul.f32 %v67, 0.5
    %v92 = vmul.f32 %v68, 0.5
    %v93 = vmul.f32 %v69, 0.5
    %v94 = vmul.f32 %v70, 0.5
    %v95 = vadd.f32 %v87, 0.5
    %v96 = vadd.f32 %v88, 0.5
    %v97 = vadd.f32 %v89, 0.5
    %v98 = vadd.f32 %v90, 0.5
    %v99 = vadd.f32 %v91, 0.5
    %v100 = vadd.f32 %v92, 0.5
    %v101 = vadd.f32 %v93, 0.5
    %v102 = vadd.f32 %v94, 0.5
    %vm103 = vcmp.lt.f32.partialorder %v63, 1.0
    %vm104 = vcmp.lt.f32.partialorder %v64, 1.0
    %vm105 = vcmp.lt.f32.partialorder %v65, 1.0
    %vm106 = vcmp.lt.f32.partialorder %v66, 1.0
    %vm107 = vcmp.lt.f32.partialorder %v67, 1.0
    %vm108 = vcmp.lt.f32.partialorder %v68, 1.0
    %vm109 = vcmp.lt.f32.partialorder %v69, 1.0
    %vm110 = vcmp.lt.f32.partialorder %v70, 1.0
    %v111 = vsel %vm103, %v79, %v95
    %v112 = vsel %vm104, %v80, %v96
    %v113 = vsel %vm105, %v81, %v97
    %v114 = vsel %vm106, %v82, %v98
    %v115 = vsel %vm107, %v83, %v99
    %v116 = vsel %vm108, %v84, %v100
    %v117 = vsel %vm109, %v85, %v101
    %v118 = vsel %vm110, %v86, %v102
    %vm119 = vcmask 1045504
    %v120 = vsel %vm119, %v111, 0.0
    %v121 = vsel %vm119, %v112, 0.0
    %v122 = vadd.f32 %v120, %v121
    %v123 = vsel %vm119, %v113, 0.0
    %v124 = vadd.f32 %v122, %v123
    %v125 = vsel %vm119, %v114, 0.0
    %v126 = vadd.f32 %v124, %v125
    %v127 = vsel %vm119, %v115, 0.0
    %v128 = vadd.f32 %v126, %v127
    %v129 = vsel %vm119, %v116, 0.0
    %v130 = vadd.f32 %v128, %v129
    %v131 = vsel %vm119, %v117, 0.0
    %v132 = vadd.f32 %v130, %v131
    %v133 = vsel %vm119, %v118, 0.0
    %v134 = vadd.f32 %v132, %v133
    %135 = vadd.xlane.f32.xlu0 %v134
    %v136 = vpop.xlane.xlu0 %135
    %v137 = vld [vmem:[%s2] sm:$0x3f]
    %v138 = vmul.f32 %v136, %v137
    %s139 = smul.u32 0, 6
    %v140 = vlaneseq
    %v141 = vshrl.u32 %v140, 7
    %v142 = vstv %s139
    %v143 = vadd.s32 %v142, %v141
    %vm144 = vcmp.lt.s32.totalorder %v143, 6
    %v145 = vsel %vm144, %v138, 0.0
    %vm146 = vcmask 5120
    %v147 = vsel %vm146, %v145, 0.0
    %148 = vadd.xlane.f32.xlu0 %v147
    %v149 = vpop.xlane.xlu0 %148
    %v150 = vrot.slane %v149, 4
    %v151 = vadd.f32 %v149, %v150
    %v152 = vrot.slane %v151, 2
    %v153 = vadd.f32 %v151, %v152
    %v154 = vrot.slane %v153, 1
    %v155 = vadd.f32 %v153, %v154
    %s156 = vtos %v155
    %v157 = vstv %s156
    %158 = vst [vmem:[#allocation7] sm:$0xff] %v157
    // Predicated region
    $region22: #{tpu_custom_call.1} parent=1 // pred_check
      _
    $region23: #{tpu_custom_call.1} parent=1 // pred_check_branch
      %160 = sbr.rel (0) target = $region25
    $region24: #{tpu_custom_call.1} parent=1 // pred_region
      %s162 = ssub.s32 128, 128
      %163 = vsyncadd [#allocation4], %s162
      %s165 = sshll.u32 [#allocation7], 4
      %s166 = int_to_ptr.vmem [resolvable:$true] %s165
      %168 = dma.vmem_to_hbm [thread:$0]  %s166, 128, %s3, [#allocation4]
    $region25: #{tpu_custom_call.1} parent=1 // pred_fallthru
      _
    // Predicated region
    $region26: #{tpu_custom_call.1} parent=1 // pred_check
      _
    $region27: #{tpu_custom_call.1} parent=1 // pred_check_branch
      %170 = sbr.rel (0) target = $region29
    $region28: #{tpu_custom_call.1} parent=1 // pred_region
      %171 = dma.done [#allocation4], 128
    $region29: #{tpu_custom_call.1} parent=1 // pred_fallthru
      _
    %172 = vsyncpa [#allocation3], 1
    %173 = vsyncpa [#allocation6], 1
    %174 = vsyncpa [#allocation4], 1

</llo_original>
